<compile_context>
chip_gen: v7x
topology: tpu7x:2x2x1
jax: 0.10.0
libtpu: 0.0.40
codegen_flags: <defaults>
</compile_context>

<pallas_src>
import jax
import jax.numpy as jnp
from jax.experimental import pallas as pl
from jax.experimental.pallas import tpu as pltpu


def _sigmoid_kernel(x_ref, o_ref):
    x = x_ref[...]
    # Exact sigmoid via a single EUP op: sigmoid(x) = 0.5 * (tanh(x/2) + 1).
    # Avoids exp(-x) overflow and the accuracy loss of approx reciprocal.
    o_ref[...] = 0.5 * (jnp.tanh(0.5 * x) + 1.0)


def sigmoid_pallas(x_nchw: jax.Array) -> jax.Array:
    orig_shape = x_nchw.shape
    n_elems = x_nchw.size

    # Present a flat (1, N) view — a cheap reshape XLA can fuse; no pad, no slice.
    x2d = x_nchw.reshape(1, n_elems)

    out2d = pl.pallas_call(
        _sigmoid_kernel,
        out_shape=jax.ShapeDtypeStruct(x2d.shape, x2d.dtype),
        in_specs=[pl.BlockSpec(memory_space=pltpu.MemorySpace.VMEM)],
        out_specs=pl.BlockSpec(memory_space=pltpu.MemorySpace.VMEM),
    )(x2d)

    return out2d.reshape(orig_shape)


if __name__ == "__main__":
    key = jax.random.PRNGKey(0)
    # Same shape as the PyTorch module's input: [1, 1824, 1, 1]
    x466 = jax.random.normal(key, (1, 1824, 1, 1), dtype=jnp.float32)

    x467 = sigmoid_pallas(x466)
    jax.block_until_ready(x467)

    # Correctness check against plain JAX reference (exact sigmoid in-kernel).
    ref = jax.nn.sigmoid(x466)
    assert x467.shape == (1, 1824, 1, 1)
    assert jnp.allclose(x467, ref, atol=1e-5, rtol=1e-5), (
        float(jnp.max(jnp.abs(x467 - ref)))
    )

    print("KERNEL_OK")
</pallas_src>

<mosaic_0001>
module attributes {stable_mosaic.version = 11 : i64} {
  func.func @_sigmoid_kernel(%arg0: memref<1x1824xf32, #tpu.memory_space<vmem>>, %arg1: memref<1x1824xf32, #tpu.memory_space<vmem>>) attributes {dimension_semantics = [], scalar_prefetch = 0 : i64, scratch_operands = 0 : i64, tpu.core_type = #tpu.core_type<tc>} {
    %c0 = arith.constant 0 : index
    %c0_0 = arith.constant 0 : index
    %0 = vector.load %arg0[%c0, %c0_0] : memref<1x1824xf32, #tpu.memory_space<vmem>>, vector<1x1824xf32>
    %cst = arith.constant 5.000000e-01 : f32
    %1 = vector.broadcast %cst : f32 to vector<1x1824xf32>
    %2 = arith.mulf %1, %0 : vector<1x1824xf32>
    %3 = math.tanh %2 : vector<1x1824xf32>
    %cst_1 = arith.constant 1.000000e+00 : f32
    %4 = vector.broadcast %cst_1 : f32 to vector<1x1824xf32>
    %5 = arith.addf %3, %4 : vector<1x1824xf32>
    %cst_2 = arith.constant 5.000000e-01 : f32
    %6 = vector.broadcast %cst_2 : f32 to vector<1x1824xf32>
    %7 = arith.mulf %6, %5 : vector<1x1824xf32>
    %c0_3 = arith.constant 0 : index
    %c0_4 = arith.constant 0 : index
    %8 = vector.load %arg1[%c0_3, %c0_4] : memref<1x1824xf32, #tpu.memory_space<vmem>>, vector<1x1824xf32>
    tpu.vector_store %arg1[%c0_3, %c0_4], %7 {strides = array<i32>} : memref<1x1824xf32, #tpu.memory_space<vmem>>, vector<1x1824xf32>,
    return
  }
}

</mosaic_0001>

<llo_original>
// kernel: tpu_custom_call.1
$region0: #{tpu_custom_call.1}
  #allocation0 [shape = 'u32[]', space=smem, size = 0x4, offset = 0x4, fixed_abs, tag = 'smem constant byte address 0x4 - core index']
  #allocation1 [shape = 'u32[144,128]{1,0:T(1,128)}', space=vmem, size = 0x12000, scoped, tag = 'internal scratch']
  %s0 = inlined_call_operand.hbm [shape: f32[1,1824], index: 0, kind: input, shape index: {}]
  %s1 = inlined_call_operand.hbm [shape: f32[1,1824], index: 1, kind: output, shape index: {}]
  %s2 = sld [smem:[#allocation0]]
  $region18: #{tpu_custom_call.1} parent=0
    _
  %s4 = ssub.s32 1, %s2
  %s5 = scalar_select 0, %s4, %s2
  $region1: #{tpu_custom_call.1} parent=0
    #allocation2 [shape = 'u8[7680]{0}', space=vmem, size = 0x2000, scoped, tag = 'input window, operand 0, single buffered']
    #allocation3 [shape = 's32[1]{0}', space=sflag, size = 0x4, scoped, tag = 'scoped memory for tpu_custom_call.1']
    #allocation4 [shape = 's32[1]{0}', space=sflag, size = 0x4, scoped, tag = 'scoped memory for tpu_custom_call.1']
    #allocation5 [shape = 'u8[7680]{0}', space=vmem, size = 0x2000, scoped, tag = 'output window, operand 0, single buffered']
    %6 = vsyncpa [#allocation3], 0
    %7 = vsyncpa [#allocation4], 0
    // Predicated region
    $region2: #{tpu_custom_call.1} parent=1 // pred_check
      _
    $region3: #{tpu_custom_call.1} parent=1 // pred_check_branch
      %9 = sbr.rel (0) target = $region5
    $region4: #{tpu_custom_call.1} parent=1 // pred_region
      %s11 = ssub.s32 240, 240
      %12 = vsyncadd [#allocation3], %s11
      %s14 = sshll.u32 [#allocation2], 4
      %s15 = int_to_ptr.vmem [resolvable:$true] %s14
      %17 = dma.hbm_to_vmem [thread:$0]  %s0, 240, %s15, [#allocation3]
    $region5: #{tpu_custom_call.1} parent=1 // pred_fallthru
      _
    // Predicated region
    $region6: #{tpu_custom_call.1} parent=1 // pred_check
      _
    $region7: #{tpu_custom_call.1} parent=1 // pred_check_branch
      %19 = sbr.rel (0) target = $region9
    $region8: #{tpu_custom_call.1} parent=1 // pred_region
      %20 = dma.done [#allocation3], 240
    $region9: #{tpu_custom_call.1} parent=1 // pred_fallthru
      _
    %v21 = vld [vmem:[#allocation2] sm:$0xff]
    %v22 = vld [vmem:[#allocation2 + $0x8] sm:$0x7f]
    %v23 = vmul.f32 %v21, 0.5
    %v24 = vmul.f32 %v22, 0.5
    %v25 = vtanh.pop %v23
    %v26 = vtanh.pop %v24
    %v27 = vadd.f32 %v25, 1.0
    %v28 = vadd.f32 %v26, 1.0
    %v29 = vmul.f32 %v27, 0.5
    %v30 = vmul.f32 %v28, 0.5
    %31 = vst [vmem:[#allocation5] sm:$0xff] %v29
    %v32 = vlaneseq
    %vm33 = vcmp.ge.s32.totalorder %v32, 0
    %vm34 = vcmp.lt.s32.totalorder %v32, 800
    %vm35 = vmand %vm33, %vm34
    %36 = vst.msk [vmem:[#allocation5 + $0x8] sm:$0x7f] %vm35, %v30
    // Predicated region
    $region10: #{tpu_custom_call.1} parent=1 // pred_check
      _
    $region11: #{tpu_custom_call.1} parent=1 // pred_check_branch
      %38 = sbr.rel (0) target = $region13
    $region12: #{tpu_custom_call.1} parent=1 // pred_region
      %s40 = ssub.s32 240, 240
      %41 = vsyncadd [#allocation4], %s40
      %s43 = sshll.u32 [#allocation5], 4
      %s44 = int_to_ptr.vmem [resolvable:$true] %s43
      %46 = dma.vmem_to_hbm [thread:$0]  %s44, 240, %s1, [#allocation4]
    $region13: #{tpu_custom_call.1} parent=1 // pred_fallthru
      _
    // Predicated region
    $region14: #{tpu_custom_call.1} parent=1 // pred_check
      _
    $region15: #{tpu_custom_call.1} parent=1 // pred_check_branch
      %48 = sbr.rel (0) target = $region17
    $region16: #{tpu_custom_call.1} parent=1 // pred_region
      %49 = dma.done [#allocation4], 240
    $region17: #{tpu_custom_call.1} parent=1 // pred_fallthru
      _
    %50 = vsyncpa [#allocation3], 1
    %51 = vsyncpa [#allocation4], 1

</llo_original>
